<compile_context>
chip_gen: v5e
topology: v5e:2x2
jax: 0.10.0
libtpu: 0.0.40
codegen_flags: <defaults>
</compile_context>

<pallas_src>
import math

import jax
import jax.numpy as jnp
from jax.experimental import pallas as pl
from jax.experimental.pallas import tpu as pltpu


def basenet_kernel(x_ref, w_ref, b_ref, o_ref):
    """One batch tile of y.T = W @ x.T + b.

    x_ref: (tm, 64)  f32/bf16 VMEM batch tile of the flattened input
    w_ref: (2, 64)   classifier weight, lane-dense, VMEM-resident across steps
    b_ref: (2, 1)    f32 classifier bias (lane-broadcast add)
    o_ref: (2, tm)   f32 lane-dense transposed output tile
    """
    yT = jax.lax.dot_general(
        w_ref[...], x_ref[...],
        dimension_numbers=(((1,), (1,)), ((), ())),   # contract the 64-feature axis
        preferred_element_type=jnp.float32,
    )                                                 # (2, tm) f32
    o_ref[...] = (yT + b_ref[...]).astype(o_ref.dtype)


def _round_up(n, m):
    return ((n + m - 1) // m) * m


def _choose_batch_tile(batch, tm_max):
    """Largest legal batch tile, but keep >= 2 grid steps for big batches so
    both v7x TensorCores get work on the "parallel" axis.

    A multi-step tile must be a multiple of 128 so the lane-dense (2, tm)
    output block stays layout-legal; a single tile equal to the full batch is
    always legal (block == full array dims)."""
    if batch <= 1024:
        return batch
    two_way = _round_up(pl.cdiv(batch, 2), 128)
    return min(tm_max, two_way)


def basenet_forward(x, w, b, *, tm=4096, small_batch_xla_threshold=512):
    """Basenet forward: y = flatten(x, 1) @ w.T + b.

    x: (B, ...) with prod(trailing dims) == 64;  w: (2, 64);  b: (2,)
    Returns (B, 2) float32.
    """
    B = x.shape[0]
    D = math.prod(x.shape[1:])
    N, K = w.shape
    assert D == K, f"Basenet classifier expects {K} flattened features, got {D}"

    x_flat = x.reshape(B, D)          # no dtype cast: bf16 inputs pass through unchanged

    # Tiny batches: a fused XLA matmul+add is strictly cheaper than the
    # pallas_call launch + single-step pipeline overhead.
    if B < small_batch_xla_threshold:
        y = jnp.dot(x_flat, w.T.astype(x_flat.dtype),
                    preferred_element_type=jnp.float32)
        return y + b.astype(jnp.float32)

    tm_eff = _choose_batch_tile(B, tm)
    grid = (pl.cdiv(B, tm_eff),)

    w_k = w.astype(x_flat.dtype)                   # (2, 64), lane-dense, no transpose
    b_k = b.reshape(N, 1).astype(jnp.float32)      # (2, 1) -> lane-broadcast in kernel

    yT = pl.pallas_call(
        basenet_kernel,
        out_shape=jax.ShapeDtypeStruct((N, B), jnp.float32),
        grid=grid,
        in_specs=[
            pl.BlockSpec((tm_eff, D), lambda i: (i, 0)),      # batch tile of x
            pl.BlockSpec((N, D), lambda i: (0, 0)),           # weight (resident)
            pl.BlockSpec((N, 1), lambda i: (0, 0)),           # bias (resident)
        ],
        out_specs=pl.BlockSpec((N, tm_eff), lambda i: (0, i)),  # lane-dense output
        compiler_params=pltpu.CompilerParams(
            dimension_semantics=("parallel",),    # batch axis: megacore-shardable
            vmem_limit_bytes=32 * 1024 * 1024,    # explicit; safe on v5e/v6e/v7x
        ),
    )(x_flat, w_k, b_k)

    # Tiny (2, B) -> (B, 2); XLA fuses this transpose with downstream consumers.
    return yT.T


if __name__ == "__main__":
    key = jax.random.PRNGKey(0)
    k_x, k_w, k_b, k_x2, k_x3 = jax.random.split(key, 5)

    # Shapes implied by the module: flatten(x, 1) must give 64 features for
    # nn.Linear(64, 2)  ->  (B=2, C=4, H=4, W=4).
    B, C, H, W = 2, 4, 4, 4
    x = jax.random.normal(k_x, (B, C, H, W), dtype=jnp.float32)
    w = jax.random.normal(k_w, (2, 64), dtype=jnp.float32) * 0.1   # classifier weight
    b = jax.random.normal(k_b, (2,), dtype=jnp.float32) * 0.1      # classifier bias

    # 1) Module-sized input, Pallas path forced (single full-array block).
    y = basenet_forward(x, w, b, small_batch_xla_threshold=0)
    jax.block_until_ready(y)
    y_ref = x.reshape(B, -1) @ w.T + b
    assert y.shape == (B, 2)
    assert jnp.allclose(y, y_ref, atol=1e-3, rtol=1e-3), "mismatch vs reference (B=2)"

    # 2) Larger ragged batch: multi-step "parallel" grid, no padding copy.
    B2 = 4100
    x2 = jax.random.normal(k_x2, (B2, C, H, W), dtype=jnp.float32)
    y2 = basenet_forward(x2, w, b)
    jax.block_until_ready(y2)
    y2_ref = x2.reshape(B2, -1) @ w.T + b
    assert jnp.allclose(y2, y2_ref, atol=1e-3, rtol=1e-3), "mismatch vs reference (ragged grid)"

    # 3) Small batch through the default dispatch (XLA fallback path).
    B3 = 33
    x3 = jax.random.normal(k_x3, (B3, C, H, W), dtype=jnp.float32)
    y3 = basenet_forward(x3, w, b)
    jax.block_until_ready(y3)
    y3_ref = x3.reshape(B3, -1) @ w.T + b
    assert jnp.allclose(y3, y3_ref, atol=1e-3, rtol=1e-3), "mismatch vs reference (XLA fallback)"

    print("KERNEL_OK")
</pallas_src>

<mosaic_0001>
module attributes {stable_mosaic.version = 11 : i64} {
  func.func @basenet_kernel(%arg0: i32, %arg1: memref<2x64xf32, #tpu.memory_space<vmem>>, %arg2: memref<2x64xf32, #tpu.memory_space<vmem>>, %arg3: memref<2x1xf32, #tpu.memory_space<vmem>>, %arg4: memref<2x2xf32, #tpu.memory_space<vmem>>) attributes {dimension_semantics = [#tpu.dimension_semantics<parallel>], iteration_bounds = array<i64: 1>, scalar_prefetch = 0 : i64, scratch_operands = 0 : i64, tpu.core_type = #tpu.core_type<tc>, window_params = [{transform_indices = @transform_0, window_bounds = array<i64: 2, 64>}, {pipeline_mode = #tpu.pipeline_mode<synchronous>, transform_indices = @transform_1, window_bounds = array<i64: 2, 64>}, {pipeline_mode = #tpu.pipeline_mode<synchronous>, transform_indices = @transform_2, window_bounds = array<i64: 2, 1>}, {transform_indices = @transform_3, window_bounds = array<i64: 2, 2>}]} {
    %c0 = arith.constant 0 : index
    %c0_0 = arith.constant 0 : index
    %0 = vector.load %arg2[%c0, %c0_0] : memref<2x64xf32, #tpu.memory_space<vmem>>, vector<2x64xf32>
    %c0_1 = arith.constant 0 : index
    %c0_2 = arith.constant 0 : index
    %1 = vector.load %arg1[%c0_1, %c0_2] : memref<2x64xf32, #tpu.memory_space<vmem>>, vector<2x64xf32>
    %cst = arith.constant dense<0.000000e+00> : vector<2x2xf32>
    %2 = tpu.matmul %0, %1, %cst {dimension_numbers = #tpu.dot_dimension_numbers<[1], [1], [0], [0], [0, 0, 1, 0], [], []>} : vector<2x64xf32>, vector<2x64xf32>, vector<2x2xf32> -> vector<2x2xf32>
    %c0_3 = arith.constant 0 : index
    %c0_4 = arith.constant 0 : index
    %3 = vector.load %arg3[%c0_3, %c0_4] : memref<2x1xf32, #tpu.memory_space<vmem>>, vector<2x1xf32>
    %4 = vector.broadcast %3 : vector<2x1xf32> to vector<2x2xf32>
    %5 = arith.addf %2, %4 : vector<2x2xf32>
    %c0_5 = arith.constant 0 : index
    %c0_6 = arith.constant 0 : index
    %6 = vector.load %arg4[%c0_5, %c0_6] : memref<2x2xf32, #tpu.memory_space<vmem>>, vector<2x2xf32>
    tpu.vector_store %arg4[%c0_5, %c0_6], %5 {strides = array<i32>} : memref<2x2xf32, #tpu.memory_space<vmem>>, vector<2x2xf32>,
    return
  }
  func.func @transform_0(%arg0: i32) -> (i32, i32) {
    %c0_i32 = arith.constant 0 : i32
    %c0_i32_0 = arith.constant 0 : i32
    return %arg0, %c0_i32 : i32, i32
  }
  func.func @transform_1(%arg0: i32) -> (i32, i32) {
    %c0_i32 = arith.constant 0 : i32
    %c0_i32_0 = arith.constant 0 : i32
    %c0_i32_1 = arith.constant 0 : i32
    return %c0_i32, %c0_i32_0 : i32, i32
  }
  func.func @transform_2(%arg0: i32) -> (i32, i32) {
    %c0_i32 = arith.constant 0 : i32
    %c0_i32_0 = arith.constant 0 : i32
    %c0_i32_1 = arith.constant 0 : i32
    return %c0_i32, %c0_i32_0 : i32, i32
  }
  func.func @transform_3(%arg0: i32) -> (i32, i32) {
    %c0_i32 = arith.constant 0 : i32
    %c0_i32_0 = arith.constant 0 : i32
    return %c0_i32, %arg0 : i32, i32
  }
}

</mosaic_0001>

<llo_original>
// kernel: tpu_custom_call.1
$region0: #{tpu_custom_call.1}
  #allocation0 [shape = 'u32[]', space=smem, size = 0x4, offset = 0x4, fixed_abs, tag = 'smem constant byte address 0x4 - core index']
  #allocation1 [shape = 'u32[72,128]{1,0:T(1,128)}', space=vmem, size = 0x9000, scoped, tag = 'internal scratch']
  %s0 = inlined_call_operand.vmem [shape: f32[2,64], index: 0, kind: input, shape index: {}]
  %s1 = inlined_call_operand.hbm [shape: f32[2,64], index: 1, kind: input, shape index: {}]
  %s2 = inlined_call_operand.vmem [shape: f32[2,1], index: 2, kind: input, shape index: {}]
  %s3 = inlined_call_operand.hbm [shape: f32[2,2], index: 3, kind: output, shape index: {}]
  %s4 = sld [smem:[#allocation0]]
  $region26: #{tpu_custom_call.1} parent=0
    _
  %s6 = ssub.s32 1, %s4
  %s7 = scalar_select 0, %s6, %s4
  $region1: #{tpu_custom_call.1} parent=0
    #allocation2 [shape = 'u8[1024]{0}', space=vmem, size = 0x400, scoped, tag = 'input window, operand 1, single buffered']
    #allocation3 [shape = 's32[1]{0}', space=sflag, size = 0x4, scoped, tag = 'scoped memory for tpu_custom_call.1']
    #allocation4 [shape = 's32[1]{0}', space=sflag, size = 0x4, scoped, tag = 'scoped memory for tpu_custom_call.1']
    #allocation5 [shape = 'u8[1024]{0}', space=vmem, size = 0x400, scoped, tag = 'output window, operand 0, single buffered']
    %8 = vsyncpa [#allocation3], 0
    %9 = vsyncpa [#allocation4], 0
    // Predicated region
    $region2: #{tpu_custom_call.1} parent=1 // pred_check
      _
    $region3: #{tpu_custom_call.1} parent=1 // pred_check_branch
      %11 = sbr.rel (0) target = $region5
    $region4: #{tpu_custom_call.1} parent=1 // pred_region
      _
    $region5: #{tpu_custom_call.1} parent=1 // pred_fallthru
      _
    // Predicated region
    $region6: #{tpu_custom_call.1} parent=1 // pred_check
      _
    $region7: #{tpu_custom_call.1} parent=1 // pred_check_branch
      %13 = sbr.rel (0) target = $region9
    $region8: #{tpu_custom_call.1} parent=1 // pred_region
      %15 = vsyncadd [#allocation3], 0
      %s17 = sshll.u32 %s1, 4
      %s18 = int_to_ptr.hbm [resolvable:$true] %s17
      %s19 = sshll.u32 [#allocation2], 4
      %s20 = int_to_ptr.vmem [resolvable:$true] %s19
      %22 = dma.hbm_to_vmem [thread:$0]  %s18, 32, %s20, [#allocation3]
    $region9: #{tpu_custom_call.1} parent=1 // pred_fallthru
      _
    // Predicated region
    $region10: #{tpu_custom_call.1} parent=1 // pred_check
      _
    $region11: #{tpu_custom_call.1} parent=1 // pred_check_branch
      %24 = sbr.rel (0) target = $region13
    $region12: #{tpu_custom_call.1} parent=1 // pred_region
      _
    $region13: #{tpu_custom_call.1} parent=1 // pred_fallthru
      _
    // Predicated region
    $region14: #{tpu_custom_call.1} parent=1 // pred_check
      _
    $region15: #{tpu_custom_call.1} parent=1 // pred_check_branch
      %26 = sbr.rel (0) target = $region17
    $region16: #{tpu_custom_call.1} parent=1 // pred_region
      %28 = dma.done [#allocation3], 32
    $region17: #{tpu_custom_call.1} parent=1 // pred_fallthru
      _
    %v29 = vld [vmem:[#allocation2] sm:$0x3]
    %v30 = vld [vmem:[%s0] sm:$0x3]
    %v31 = vld [vmem:[%s2] sm:$0x3]
    %33 = vset.pattern.permute.xlu0 0
    %34 = vperm.xlu0 %33, %v31
    %v35 = vpop.permute.xlu0 %34
    %vm37 = vcmask 523264
    %v39 = vsel %vm37, %v29, 0
    %v42 = vsel %vm37, %v30, 0
    %44 = vmatpush.xpose.msra.mxu0 0.0
    %45 = vmatpush.xpose.msra.mxu0 0.0
    %46 = vmatpush.xpose.msra.mxu0 0.0
    %47 = vmatpush.xpose.msra.mxu0 0.0
    %48 = vmatpush.xpose.msra.mxu0 0.0
    %49 = vmatpush.xpose.msra.mxu0 0.0
    %50 = vmatpush.xpose.msra.mxu0 0.0
    %51 = vmatpush.xpose.msra.mxu0 0.0
    %52 = vmatpush.xpose.msra.mxu0 0.0
    %53 = vmatpush.xpose.msra.mxu0 0.0
    %54 = vmatpush.xpose.msra.mxu0 0.0
    %55 = vmatpush.xpose.msra.mxu0 0.0
    %56 = vmatpush.xpose.msra.mxu0 0.0
    %57 = vmatpush.xpose.msra.mxu0 0.0
    %58 = vmatpush.xpose.msra.mxu0 0.0
    %59 = vmatpush.xpose.msra.mxu0 %v42
    %60 = vmatmul.f32.gmra.mxu0 %v39
    %v61 = vpop.f32.mrf.mxu0
    %v62 = vadd.f32 %v35, %v61
    %63 = vdwg.mxu0
    %vm64 = vcmask 9216
    %65 = vst.msk [vmem:[#allocation5] sm:$0x3] %vm64, %v62
    // Predicated region
    $region18: #{tpu_custom_call.1} parent=1 // pred_check
      _
    $region19: #{tpu_custom_call.1} parent=1 // pred_check_branch
      %67 = sbr.rel (0) target = $region21
    $region20: #{tpu_custom_call.1} parent=1 // pred_region
      %69 = vsyncadd [#allocation4], 0
      %s71 = sshll.u32 [#allocation5], 4
      %s72 = int_to_ptr.vmem [resolvable:$true] %s71
      %s73 = sshll.u32 %s3, 4
      %s74 = int_to_ptr.hbm [resolvable:$true] %s73
      %76 = dma.vmem_to_hbm [thread:$0]  %s72, 32, %s74, [#allocation4]
    $region21: #{tpu_custom_call.1} parent=1 // pred_fallthru
      _
    // Predicated region
    $region22: #{tpu_custom_call.1} parent=1 // pred_check
      _
    $region23: #{tpu_custom_call.1} parent=1 // pred_check_branch
      %78 = sbr.rel (0) target = $region25
    $region24: #{tpu_custom_call.1} parent=1 // pred_region
      %80 = dma.done [#allocation4], 32
    $region25: #{tpu_custom_call.1} parent=1 // pred_fallthru
      _
    %81 = vsyncpa [#allocation3], 1
    %82 = vsyncpa [#allocation4], 1

</llo_original>
